<compile_context>
chip_gen: v7x
topology: tpu7x:2x2x1
jax: 0.10.0
libtpu: 0.0.40
codegen_flags: <defaults>
</compile_context>

<pallas_src>
import numpy as np
import jax
import jax.numpy as jnp
from jax.experimental import pallas as pl
from jax.experimental.pallas import tpu as pltpu


def _round_up(x, m):
    return ((x + m - 1) // m) * m


def _make_unfold_kernel(length, padded_len, pad_size, padding_type):
    """Returns (kernel, needs_perm_input)."""

    if pad_size > 0 and padding_type == 'reflect':
        def kernel(x_ref, perm_ref, o_ref):
            # Bulk: valid samples copied verbatim, lane-dense contiguous store.
            o_ref[:, :length] = x_ref[...]
            # Reflect tail: x[L-2], x[L-3], ..., x[L-1-pad].  Exact 0/1
            # anti-diagonal permutation matmul (f32 accumulation).
            window = x_ref[:, length - 1 - pad_size:length - 1]
            tail = jnp.dot(window, perm_ref[...],
                           preferred_element_type=jnp.float32)
            o_ref[:, length:padded_len] = tail.astype(o_ref.dtype)
        return kernel, True

    def kernel(x_ref, o_ref):
        o_ref[:, :length] = x_ref[...]
        if pad_size > 0:
            rows = x_ref.shape[0]
            if padding_type == 'replicate':
                tail = jnp.broadcast_to(x_ref[:, length - 1:length],
                                        (rows, pad_size))
            elif padding_type == 'constant':
                # NOTE: matches torch F.pad default (value=0.0).
                tail = jnp.zeros((rows, pad_size), dtype=x_ref.dtype)
            else:
                raise ValueError(f"unsupported padding_type: {padding_type}")
            o_ref[:, length:padded_len] = tail.astype(o_ref.dtype)

    return kernel, False


def unfold1d_forward(data, patch_size=200, use_padding=True,
                     padding_type='reflect', tile_b=None):
    """Pallas implementation of Unfold1D.forward.  data: (B, 1, L), float."""
    assert data.ndim == 3, "Unfold1D expects a 3-D tensor (B, C, L)"
    B, C, L = data.shape
    # TODO(synk): torch's raw reshape also runs for C > 1 (channels interleave
    # into patches); only the documented C == 1 case is implemented here.
    assert C == 1, "Unfold1D assumes the channel dimension is one"
    x = data.reshape(B, L)  # squeeze of a size-1 dim: free

    if use_padding and L % patch_size != 0:
        pad_size = patch_size - L % patch_size
    else:
        pad_size = 0
    if not use_padding and L % patch_size != 0:
        raise ValueError("length must be divisible by patch_size when use_padding=False")
    if padding_type == 'reflect' and pad_size >= L:
        raise ValueError("reflect padding requires pad_size < length (as in torch)")

    padded_len = L + pad_size
    num_patches = padded_len // patch_size
    itemsize = x.dtype.itemsize

    # --- generation-aware VMEM budgeting -----------------------------------
    try:
        cap = int(getattr(pltpu.get_tpu_info(), "vmem_capacity_bytes", 0)) or (128 << 20)
    except Exception:
        cap = 128 << 20
    vmem_limit = min(64 << 20, (cap * 3) // 4)   # 64 MiB on v5e/v6e, 48 MiB on v7x
    budget = (vmem_limit * 3) // 4               # headroom inside the limit

    # Physically (8,128)-tiled per-batch-row footprint of the double-buffered
    # input + output slabs (lane-dense output: no (num_patches,200)->(8,256)
    # padding blowup anymore).
    per_row = 2 * (_round_up(L, 128) + _round_up(padded_len, 128)) * itemsize

    if tile_b is None:
        tile_b = max(1, budget // max(per_row, 1))
        if B >= 32:
            # keep >= ~4 grid steps so both v7x TensorCores and the DMA
            # pipeline have work on large batches
            tile_b = min(tile_b, _round_up(pl.cdiv(B, 4), 8))
        if tile_b >= B:
            tile_b = B
        else:
            tile_b = max(8, (tile_b // 8) * 8)
            # even out the blocks so the last grid step is not mostly wasted DMA
            n_steps = pl.cdiv(B, tile_b)
            tile_b = min(tile_b, _round_up(pl.cdiv(B, n_steps), 8))
    tile_b = min(tile_b, B)

    # Never let the rounding above silently exceed the scoped-VMEM limit.
    needed = tile_b * per_row + (1 << 20)
    vmem_limit = int(min(max(vmem_limit, needed), max(cap - (4 << 20), vmem_limit)))

    grid = (pl.cdiv(B, tile_b),)
    kernel, needs_perm = _make_unfold_kernel(L, padded_len, pad_size, padding_type)

    in_specs = [pl.BlockSpec((tile_b, L), lambda i: (i, 0))]
    operands = [x]
    if needs_perm:
        # Tiny 0/1 anti-diagonal matrix, built once at trace time with numpy.
        # Block shape == full array shape, so (8,128) tiling is not required.
        perm = jnp.asarray(np.eye(pad_size, dtype=np.float32)[::-1].copy(),
                           dtype=x.dtype)
        in_specs.append(pl.BlockSpec((pad_size, pad_size), lambda i: (0, 0)))
        operands.append(perm)

    cost = pl.CostEstimate(
        flops=2 * B * pad_size * pad_size if needs_perm else 0,
        transcendentals=0,
        bytes_accessed=B * (L + padded_len) * itemsize,
    )

    out2d = pl.pallas_call(
        kernel,
        out_shape=jax.ShapeDtypeStruct((B, padded_len), x.dtype),
        grid_spec=pltpu.PrefetchScalarGridSpec(
            num_scalar_prefetch=0,
            grid=grid,
            in_specs=in_specs,
            out_specs=pl.BlockSpec((tile_b, padded_len), lambda i: (i, 0)),
        ),
        compiler_params=pltpu.CompilerParams(
            dimension_semantics=("parallel",),   # megacore-shardable batch axis
            vmem_limit_bytes=vmem_limit,
        ),
        cost_estimate=cost,
    )(*operands)

    # Pure layout plumbing: (B, padded_len) -> (B, num_patches, patch_size).
    return out2d.reshape(B, num_patches, patch_size)


def _reference(data, patch_size, use_padding=True, padding_type='reflect'):
    B, C, L = data.shape
    pad = (patch_size - L % patch_size) if (use_padding and L % patch_size) else 0
    mode = {'reflect': 'reflect', 'replicate': 'edge', 'constant': 'constant'}[padding_type]
    padded = jnp.pad(data, ((0, 0), (0, 0), (0, pad)), mode=mode)
    num_patches = padded.shape[-1] // patch_size
    return padded.reshape(B, num_patches, -1)


if __name__ == "__main__":
    key = jax.random.PRNGKey(0)

    # Case 1: reflect padding path. batch=2, channel=1, seq=500, patch=200
    # -> reflect-pad by 100, 3 patches of 200 each.
    B, C, L = 2, 1, 500
    patch_size = 200
    data = jax.random.normal(key, (B, C, L), jnp.float32)

    out = unfold1d_forward(data, patch_size=patch_size)
    out = jax.block_until_ready(out)
    ref = _reference(data, patch_size)
    assert out.shape == ref.shape == (B, 3, patch_size)
    assert jnp.allclose(out, ref, atol=1e-6, rtol=0.0), "mismatch vs reference (reflect)"

    # Case 2: no-padding path (length divisible by patch_size).
    data2 = jax.random.normal(jax.random.PRNGKey(1), (2, 1, 400), jnp.float32)
    out2 = jax.block_until_ready(unfold1d_forward(data2, patch_size=patch_size))
    ref2 = _reference(data2, patch_size)
    assert out2.shape == ref2.shape == (2, 2, patch_size)
    assert jnp.allclose(out2, ref2, atol=1e-6, rtol=0.0), "mismatch vs reference (no pad)"

    print("KERNEL_OK")
</pallas_src>

<mosaic_0001>
module attributes {stable_mosaic.version = 11 : i64} {
  func.func @kernel(%arg0: i32, %arg1: memref<2x500xf32, #tpu.memory_space<vmem>>, %arg2: memref<100x100xf32, #tpu.memory_space<vmem>>, %arg3: memref<2x600xf32, #tpu.memory_space<vmem>>) attributes {dimension_semantics = [#tpu.dimension_semantics<parallel>], iteration_bounds = array<i64: 1>, scalar_prefetch = 0 : i64, scratch_operands = 0 : i64, tpu.core_type = #tpu.core_type<tc>, window_params = [{transform_indices = @transform_0, window_bounds = array<i64: 2, 500>}, {pipeline_mode = #tpu.pipeline_mode<synchronous>, transform_indices = @transform_1, window_bounds = array<i64: 100, 100>}, {transform_indices = @transform_2, window_bounds = array<i64: 2, 600>}]} {
    %c0 = arith.constant 0 : index
    %c0_0 = arith.constant 0 : index
    %0 = vector.load %arg1[%c0, %c0_0] : memref<2x500xf32, #tpu.memory_space<vmem>>, vector<2x500xf32>
    %c0_1 = arith.constant 0 : index
    %c0_2 = arith.constant 0 : index
    %1 = vector.load %arg3[%c0_1, %c0_2] : memref<2x600xf32, #tpu.memory_space<vmem>>, vector<2x500xf32>
    tpu.vector_store %arg3[%c0_1, %c0_2], %0 {strides = array<i32>} : memref<2x600xf32, #tpu.memory_space<vmem>>, vector<2x500xf32>,
    %c0_3 = arith.constant 0 : index
    %c399 = arith.constant 399 : index
    %2 = vector.load %arg1[%c0_3, %c399] : memref<2x500xf32, #tpu.memory_space<vmem>>, vector<2x100xf32>
    %c0_4 = arith.constant 0 : index
    %c0_5 = arith.constant 0 : index
    %3 = vector.load %arg2[%c0_4, %c0_5] : memref<100x100xf32, #tpu.memory_space<vmem>>, vector<100x100xf32>
    %cst = arith.constant dense<0.000000e+00> : vector<2x100xf32>
    %4 = tpu.matmul %2, %3, %cst {dimension_numbers = #tpu.dot_dimension_numbers<[1], [0], [0], [1], [0, 0, 1, 1], [], []>} : vector<2x100xf32>, vector<100x100xf32>, vector<2x100xf32> -> vector<2x100xf32>
    %c0_6 = arith.constant 0 : index
    %c500 = arith.constant 500 : index
    %5 = vector.load %arg3[%c0_6, %c500] : memref<2x600xf32, #tpu.memory_space<vmem>>, vector<2x100xf32>
    tpu.vector_store %arg3[%c0_6, %c500], %4 {strides = array<i32>} : memref<2x600xf32, #tpu.memory_space<vmem>>, vector<2x100xf32>,
    return
  }
  func.func @transform_0(%arg0: i32) -> (i32, i32) {
    %c0_i32 = arith.constant 0 : i32
    %c0_i32_0 = arith.constant 0 : i32
    return %arg0, %c0_i32 : i32, i32
  }
  func.func @transform_1(%arg0: i32) -> (i32, i32) {
    %c0_i32 = arith.constant 0 : i32
    %c0_i32_0 = arith.constant 0 : i32
    %c0_i32_1 = arith.constant 0 : i32
    return %c0_i32, %c0_i32_0 : i32, i32
  }
  func.func @transform_2(%arg0: i32) -> (i32, i32) {
    %c0_i32 = arith.constant 0 : i32
    %c0_i32_0 = arith.constant 0 : i32
    return %arg0, %c0_i32 : i32, i32
  }
}

</mosaic_0001>

<llo_original>
// kernel: tpu_custom_call.1
$region0: #{tpu_custom_call.1}
  #allocation0 [shape = 'u32[]', space=smem, size = 0x4, offset = 0x4, fixed_abs, tag = 'smem constant byte address 0x4 - core index']
  #allocation1 [shape = 'u32[144,128]{1,0:T(1,128)}', space=vmem, size = 0x12000, scoped, tag = 'internal scratch']
  %s0 = inlined_call_operand.hbm [shape: f32[2,500], index: 0, kind: input, shape index: {}]
  %s1 = inlined_call_operand.hbm [shape: f32[100,100], index: 1, kind: input, shape index: {}]
  %s2 = inlined_call_operand.hbm [shape: f32[2,600], index: 2, kind: output, shape index: {}]
  %s3 = sld [smem:[#allocation0]]
  $region26: #{tpu_custom_call.1} parent=0
    _
  %s5 = ssub.s32 1, %s3
  %s6 = scalar_select 0, %s5, %s3
  $region1: #{tpu_custom_call.1} parent=0
    #allocation2 [shape = 'u8[4096]{0}', space=vmem, size = 0x1000, scoped, tag = 'input window, operand 0, single buffered']
    #allocation3 [shape = 's32[1]{0}', space=sflag, size = 0x4, scoped, tag = 'scoped memory for tpu_custom_call.1']
    #allocation4 [shape = 's32[1]{0}', space=sflag, size = 0x4, scoped, tag = 'scoped memory for tpu_custom_call.1']
    #allocation5 [shape = 'u8[53248]{0}', space=vmem, size = 0xd000, scoped, tag = 'input window, operand 1, single buffered']
    #allocation6 [shape = 's32[1]{0}', space=sflag, size = 0x4, scoped, tag = 'scoped memory for tpu_custom_call.1']
    #allocation7 [shape = 'u8[5120]{0}', space=vmem, size = 0x1400, scoped, tag = 'output window, operand 0, single buffered']
    %7 = vsyncpa [#allocation3], 0
    %8 = vsyncpa [#allocation6], 0
    %9 = vsyncpa [#allocation4], 0
    // Predicated region
    $region2: #{tpu_custom_call.1} parent=1 // pred_check
      _
    $region3: #{tpu_custom_call.1} parent=1 // pred_check_branch
      %11 = sbr.rel (0) target = $region5
    $region4: #{tpu_custom_call.1} parent=1 // pred_region
      %s13 = ssub.s32 128, 128
      %14 = vsyncadd [#allocation3], %s13
      %s16 = sshll.u32 [#allocation2], 4
      %s17 = int_to_ptr.vmem [resolvable:$true] %s16
      %19 = dma.hbm_to_vmem [thread:$0]  %s0, 128, %s17, [#allocation3]
    $region5: #{tpu_custom_call.1} parent=1 // pred_fallthru
      _
    // Predicated region
    $region6: #{tpu_custom_call.1} parent=1 // pred_check
      _
    $region7: #{tpu_custom_call.1} parent=1 // pred_check_branch
      %21 = sbr.rel (0) target = $region9
    $region8: #{tpu_custom_call.1} parent=1 // pred_region
      %s23 = ssub.s32 1664, 1664
      %24 = vsyncadd [#allocation6], %s23
      %s25 = sshll.u32 [#allocation5], 4
      %s26 = int_to_ptr.vmem [resolvable:$true] %s25
      %31 = dma.hbm_to_vmem [thread:$0]  %s1, 1664, %s26, [#allocation6], 128, 128, 8
    $region9: #{tpu_custom_call.1} parent=1 // pred_fallthru
      _
    // Predicated region
    $region10: #{tpu_custom_call.1} parent=1 // pred_check
      _
    $region11: #{tpu_custom_call.1} parent=1 // pred_check_branch
      %33 = sbr.rel (0) target = $region13
    $region12: #{tpu_custom_call.1} parent=1 // pred_region
      %34 = dma.done [#allocation3], 128
    $region13: #{tpu_custom_call.1} parent=1 // pred_fallthru
      _
    // Predicated region
    $region14: #{tpu_custom_call.1} parent=1 // pred_check
      _
    $region15: #{tpu_custom_call.1} parent=1 // pred_check_branch
      %36 = sbr.rel (0) target = $region17
    $region16: #{tpu_custom_call.1} parent=1 // pred_region
      %37 = dma.done [#allocation6], 1664
    $region17: #{tpu_custom_call.1} parent=1 // pred_fallthru
      _
    %v38 = vld [vmem:[#allocation2] sm:$0xff]
    %vm39 = vcmask 1041408
    %vm40 = vcmask 1043458
    %vm41 = vmor %vm40, %vm39
    %vm42 = vcmask 1045508
    %vm43 = vmor %vm42, %vm41
    %vm44 = vcmask 949254
    %vm45 = vmor %vm44, %vm43
    %46 = vst.msk [vmem:[#allocation7] sm:$0xff] %vm45, %v38
    %v47 = vld [vmem:[#allocation2 + $0x6] sm:$0x3]
    %v48 = vld [vmem:[#allocation5] sm:$0xff]
    %v49 = vld [vmem:[#allocation5 + $0x8] sm:$0xff]
    %v50 = vld [vmem:[#allocation5 + $0x10] sm:$0xff]
    %v51 = vld [vmem:[#allocation5 + $0x18] sm:$0xff]
    %v52 = vld [vmem:[#allocation5 + $0x20] sm:$0xff]
    %v53 = vld [vmem:[#allocation5 + $0x28] sm:$0xff]
    %v54 = vld [vmem:[#allocation5 + $0x30] sm:$0xff]
    %v55 = vld [vmem:[#allocation5 + $0x38] sm:$0xff]
    %v56 = vld [vmem:[#allocation5 + $0x40] sm:$0xff]
    %v57 = vld [vmem:[#allocation5 + $0x48] sm:$0xff]
    %v58 = vld [vmem:[#allocation5 + $0x50] sm:$0xff]
    %v59 = vld [vmem:[#allocation5 + $0x58] sm:$0xff]
    %v60 = vld [vmem:[#allocation5 + $0x60] sm:$0xf]
    %v63 = vunpack.c.l.s4 1983009808
    %v64 = vunpack.c.0.s8 %v63
    %v65 = vlaneseq
    %v66 = vshrl.u32 %v65, 7
    %v67 = vsub.s32 %v64, %v66
    %v68 = vrot.slane %v47, %v67
    %69 = vrot.lane.b32.xlu0 %v68, 113
    %v70 = vpop.permute.xlu0 %69
    %vm71 = vcmask 818176
    %v72 = vsel %vm71, %v70, 0
    %vm74 = vcmask 1043456
    %v76 = vsel %vm74, %v60, 0
    %78 = vmatprep.subr.mxu0 0.0
    %79 = vmatpush1.msra.mxu0 %v48
    %80 = vmatprep.subr.mxu0 0.0
    %81 = vmatpush1.msra.mxu0 %v49
    %82 = vmatprep.subr.mxu0 0.0
    %83 = vmatpush1.msra.mxu0 %v50
    %84 = vmatprep.subr.mxu0 0.0
    %85 = vmatpush1.msra.mxu0 %v51
    %86 = vmatprep.subr.mxu0 0.0
    %87 = vmatpush1.msra.mxu0 %v52
    %88 = vmatprep.subr.mxu0 0.0
    %89 = vmatpush1.msra.mxu0 %v53
    %90 = vmatprep.subr.mxu0 0.0
    %91 = vmatpush1.msra.mxu0 %v54
    %92 = vmatprep.subr.mxu0 0.0
    %93 = vmatpush1.msra.mxu0 %v55
    %94 = vmatprep.subr.mxu0 0.0
    %95 = vmatpush1.msra.mxu0 %v56
    %96 = vmatprep.subr.mxu0 0.0
    %97 = vmatpush1.msra.mxu0 %v57
    %98 = vmatprep.subr.mxu0 0.0
    %99 = vmatpush1.msra.mxu0 %v58
    %100 = vmatprep.subr.mxu0 0.0
    %101 = vmatpush1.msra.mxu0 %v59
    %102 = vmatprep.subr.mxu0 0.0
    %103 = vmatpush1.msra.mxu0 %v76
    %104 = vmatprep.subr.mxu0 0.0
    %105 = vmatpush1.msra.mxu0 0.0
    %106 = vmatprep.subr.mxu0 0.0
    %107 = vmatpush1.msra.mxu0 0.0
    %108 = vmatprep.subr.mxu0 0.0
    %109 = vmatpush1.msra.mxu0 0.0
    %110 = vmatprep.subr.mxu0 0.0
    %111 = vmatpush1.msra.mxu0 0.0
    %112 = vmatprep.subr.mxu0 0.0
    %113 = vmatpush1.msra.mxu0 0.0
    %114 = vmatprep.subr.mxu0 0.0
    %115 = vmatpush1.msra.mxu0 0.0
    %116 = vmatprep.subr.mxu0 0.0
    %117 = vmatpush1.msra.mxu0 0.0
    %118 = vmatprep.subr.mxu0 0.0
    %119 = vmatpush1.msra.mxu0 0.0
    %120 = vmatprep.subr.mxu0 0.0
    %121 = vmatpush1.msra.mxu0 0.0
    %122 = vmatprep.subr.mxu0 0.0
    %123 = vmatpush1.msra.mxu0 0.0
    %124 = vmatprep.subr.mxu0 0.0
    %125 = vmatpush1.msra.mxu0 0.0
    %126 = vmatprep.subr.mxu0 0.0
    %127 = vmatpush1.msra.mxu0 0.0
    %128 = vmatprep.subr.mxu0 0.0
    %129 = vmatpush1.msra.mxu0 0.0
    %130 = vmatprep.subr.mxu0 0.0
    %131 = vmatpush1.msra.mxu0 0.0
    %132 = vmatprep.subr.mxu0 0.0
    %133 = vmatpush1.msra.mxu0 0.0
    %134 = vmatprep.subr.mxu0 0.0
    %135 = vmatpush1.msra.mxu0 0.0
    %136 = vmatprep.subr.mxu0 0.0
    %137 = vmatpush1.msra.mxu0 0.0
    %138 = vmatprep.subr.mxu0 0.0
    %139 = vmatpush1.msra.mxu0 0.0
    %140 = vmatprep.subr.mxu0 0.0
    %141 = vmatpush1.msra.mxu0 0.0
    %142 = vmatprep.mubr.f32.mxu0 0.0
    %143 = vmatmul.mubr.f32.gmra.mrb[0].mxu0 %v72
    %v144 = vpop.f32.mrb[0].mxu0
    %v145 = vadd.f32 0.0, %v144
    %v146 = vpop.f32.mrb[0].mxu0
    %147 = vdwg.mxu0
    %v150 = vunpack.c.l.s4 1983009808
    %v151 = vunpack.c.0.s8 %v150
    %v152 = vlaneseq
    %v153 = vshrl.u32 %v152, 7
    %v154 = vsub.s32 %v151, %v153
    %v155 = vrot.slane %v145, %v154
    %156 = vrot.lane.b32.xlu0 %v155, 116
    %v157 = vpop.permute.xlu0 %156
    %v158 = vrot.slane %v157, 6
    %vm159 = vcmask 949248
    %v160 = vsel %vm159, %v158, %v157
    %vm162 = vcmask 1042336
    %vm163 = vcmask 715778
    %vm164 = vmor %vm163, %vm162
    %165 = vst.msk [vmem:[#allocation7 + $0x6] sm:$0xf] %vm164, %v160
    // Predicated region
    $region18: #{tpu_custom_call.1} parent=1 // pred_check
      _
    $region19: #{tpu_custom_call.1} parent=1 // pred_check_branch
      %167 = sbr.rel (0) target = $region21
    $region20: #{tpu_custom_call.1} parent=1 // pred_region
      %s169 = ssub.s32 160, 160
      %170 = vsyncadd [#allocation4], %s169
      %s172 = sshll.u32 [#allocation7], 4
      %s173 = int_to_ptr.vmem [resolvable:$true] %s172
      %175 = dma.vmem_to_hbm [thread:$0]  %s173, 160, %s2, [#allocation4]
    $region21: #{tpu_custom_call.1} parent=1 // pred_fallthru
      _
    // Predicated region
    $region22: #{tpu_custom_call.1} parent=1 // pred_check
      _
    $region23: #{tpu_custom_call.1} parent=1 // pred_check_branch
      %177 = sbr.rel (0) target = $region25
    $region24: #{tpu_custom_call.1} parent=1 // pred_region
      %178 = dma.done [#allocation4], 160
    $region25: #{tpu_custom_call.1} parent=1 // pred_fallthru
      _
    %179 = vsyncpa [#allocation3], 1
    %180 = vsyncpa [#allocation6], 1
    %181 = vsyncpa [#allocation4], 1

</llo_original>
